<compile_context>
chip_gen: v7x
topology: tpu7x:2x2x1
jax: 0.10.0
libtpu: 0.0.40
codegen_flags: <defaults>
</compile_context>

<pallas_src>
import jax
import jax.numpy as jnp
import numpy as np
from jax.experimental import pallas as pl
from jax.experimental.pallas import tpu as pltpu


def adapter_router_kernel(x_ref, wa_ref, ba_ref, wb_ref, wvec_ref, ybias_ref,
                          o_ref):
    """One (batch, seq-tile) step: conv_A -> SiLU -> route-scale -> conv_B -> +bias +residual."""
    xb = x_ref[...]                                      # (TN, D), source dtype
    xc = xb.astype(wa_ref.dtype)                         # bf16 MXU operand (no-op when x is bf16)

    # fused conv_A over ALL experts: one (D, R*H) matmul, f32 accumulation
    h = jnp.dot(xc, wa_ref[...],
                preferred_element_type=jnp.float32) + ba_ref[...]      # (TN, R*H)
    # TODO(synk): Dropout(p=0.1) omitted (eval-mode identity).
    h = h * jax.nn.sigmoid(h)                            # SiLU in f32 (sigmoid -> EUP slot)
    # per-expert routing scale (scale * w_i) on the narrow dim, then bf16 for MXU
    h = (h * wvec_ref[...]).astype(wb_ref.dtype)

    # conv_B for all experts+groups in ONE matmul against the block-diagonal
    # (R*H, D) weight; the expert sum happens inside the MXU contraction.
    y = jnp.dot(h, wb_ref[...], preferred_element_type=jnp.float32)   # (TN, D) f32

    # fused epilogue: bias + residual in f32, single downcast, single store
    o_ref[...] = (y + ybias_ref[...] + xb.astype(jnp.float32)).astype(o_ref.dtype)


def _pick_tile_and_vmem(N, D, K2, x_itemsize, out_itemsize, weight_bytes,
                        seq_block):
    """Generation-aware seq tile & VMEM budget (v7x: 64 MiB/TC; v5e/v6e: 128 MiB)."""
    try:
        phys = int(pltpu.get_tpu_info().vmem_capacity_bytes)
    except Exception:                                    # no info -> conservative (v7x per-TC)
        phys = 64 * 2**20
    if phys <= 64 * 2**20:
        budget = phys - 8 * 2**20                        # v7x-class: compiler headroom
    else:
        budget = min(phys - 16 * 2**20, 112 * 2**20)     # v5e/v6e: allow the big tiles

    def footprint(tn):
        io = 2 * tn * D * (x_itemsize + out_itemsize)    # double-buffered in + out tiles
        xc = tn * D * 2 if x_itemsize != 2 else 0        # bf16 cast copy of the input tile
        hh = tn * K2 * (4 + 2)                           # f32 activation + bf16 cast
        yy = tn * D * 4                                  # f32 conv_B result / residual sum
        return 2 * weight_bytes + io + xc + hh + yy

    candidates = (1024, 512, 256, 128) if seq_block is None else (int(seq_block),)
    tn = min(N, candidates[-1])
    for cand in candidates:
        tn = min(N, cand)                                # == N (full dim) or a multiple of 128
        if footprint(tn) <= budget:
            break
    vmem_limit = int(min(budget, max(32 * 2**20, footprint(tn) + 4 * 2**20)))
    return tn, vmem_limit


def adapter_router_plus(x, params, *, scale, t, groups, seq_block=None,
                        compute_dtype=jnp.bfloat16):
    B, N, D = x.shape
    R, _, H = params["wa"].shape
    assert H % groups == 0 and D % groups == 0, "groups must divide H and D"
    Hg, Dg = H // groups, D // groups
    K2 = R * H

    # ---- router hoisted to plain JAX (trivial B*R work; exact softmax) -----
    x0 = x[:, 0, :].astype(jnp.float32)
    logits = x0 @ params["we"].T.astype(jnp.float32) + params["be"].astype(jnp.float32)
    w = jax.nn.softmax(logits / float(t), axis=-1)                   # (B, R)
    sw = w * float(scale)                                            # scale * w_i
    wvec = jnp.repeat(sw, H, axis=-1).reshape(B, 1, K2)              # per fused hidden column
    ybias = (sw @ params["bb"].astype(jnp.float32)).reshape(B, 1, D) # fused conv_B bias

    # ---- host-side weight re-layout -----------------------------------------
    # conv_A: (R, D, H) -> (D, R*H), natural (r, h) column order
    wa_cat = jnp.transpose(params["wa"], (1, 0, 2)).reshape(D, K2).astype(compute_dtype)
    ba_cat = params["ba"].reshape(1, K2).astype(jnp.float32)
    # conv_B: grouped (R, D, Hg) -> block-diagonal (R*H, D)
    wb_rg = jnp.transpose(params["wb"].reshape(R, groups, Dg, Hg), (0, 1, 3, 2))  # (R,G,Hg,Dg)
    wb_bd = jnp.einsum("rghd,gk->rghkd", wb_rg,
                       jnp.eye(groups, dtype=jnp.float32)).reshape(K2, D).astype(compute_dtype)

    weight_bytes = (int(np.prod(wa_cat.shape)) * wa_cat.dtype.itemsize
                    + int(np.prod(ba_cat.shape)) * ba_cat.dtype.itemsize
                    + int(np.prod(wb_bd.shape)) * wb_bd.dtype.itemsize
                    + 4 * (K2 + D))                                   # per-batch wvec/ybias tiles
    tn, vmem_limit = _pick_tile_and_vmem(N, D, K2, x.dtype.itemsize,
                                         x.dtype.itemsize, weight_bytes, seq_block)
    nt = pl.cdiv(N, tn)

    cost = pl.CostEstimate(
        flops=int(4 * B * N * D * K2),                   # conv_A + conv_B matmuls
        transcendentals=int(B * N * K2),                 # sigmoid inside SiLU
        bytes_accessed=int(2 * B * N * D * x.dtype.itemsize
                           + weight_bytes + B * (K2 + D) * 4))

    return pl.pallas_call(
        adapter_router_kernel,
        out_shape=jax.ShapeDtypeStruct((B, N, D), x.dtype),
        grid_spec=pltpu.PrefetchScalarGridSpec(
            num_scalar_prefetch=0,
            grid=(B, nt),
            in_specs=[
                pl.BlockSpec((pl.Squeezed(), tn, D), lambda b, j: (b, j, 0)),   # x tile
                pl.BlockSpec((D, K2), lambda b, j: (0, 0)),                      # fused conv_A weight
                pl.BlockSpec((1, K2), lambda b, j: (0, 0)),                      # fused conv_A bias
                pl.BlockSpec((K2, D), lambda b, j: (0, 0)),                      # block-diag conv_B weight
                pl.BlockSpec((pl.Squeezed(), 1, K2), lambda b, j: (b, 0, 0)),    # routing scales (per b)
                pl.BlockSpec((pl.Squeezed(), 1, D), lambda b, j: (b, 0, 0)),     # fused conv_B bias (per b)
            ],
            out_specs=pl.BlockSpec((pl.Squeezed(), tn, D), lambda b, j: (b, j, 0)),
        ),
        compiler_params=pltpu.CompilerParams(
            dimension_semantics=("parallel", "parallel"),
            vmem_limit_bytes=vmem_limit),
        cost_estimate=cost,
    )(x, wa_cat, ba_cat, wb_bd, wvec, ybias)


def adapter_router_plus_ref(x, params, *, scale, t, groups):
    """Plain-JAX fp32 reference mirroring the PyTorch forward (grouped conv_B)."""
    B, N, D = x.shape
    R, _, H = params["wa"].shape
    Hg, Dg = H // groups, D // groups
    logits = x[:, 0, :] @ params["we"].T + params["be"]              # (B, R)
    w = jax.nn.softmax(logits / t, axis=-1)
    out = jnp.zeros_like(x)
    for r in range(R):
        h = jax.nn.silu(x @ params["wa"][r] + params["ba"][r])       # (B, N, H)
        y_groups = []
        for g in range(groups):
            hg = h[..., g * Hg:(g + 1) * Hg]                         # (B, N, Hg)
            wbg = params["wb"][r, g * Dg:(g + 1) * Dg, :]            # (Dg, Hg)
            y_groups.append(hg @ wbg.T)                              # (B, N, Dg)
        y = jnp.concatenate(y_groups, axis=-1) + params["bb"][r]
        out = out + y * scale * w[:, r][:, None, None]
    return out + x


if __name__ == "__main__":
    # Small shapes consistent with the module:
    B, N, D = 2, 8, 32        # batch, seq, lavin_in_features
    H = 8                     # lavin_hidden_dim
    R = 2                     # lavin_n_router
    GROUPS = 2                # lavin_groups (divides both H and D)
    SCALE = 1.0               # lavin_scale
    T = 10.0                  # lavin_t

    key = jax.random.PRNGKey(0)
    kx, kwe, kbe, kwa, kba, kwb, kbb = jax.random.split(key, 7)

    x = jax.random.normal(kx, (B, N, D), dtype=jnp.float32)

    # Non-zero synthetic parameters (the module zero-inits conv_B, which would
    # make the adapters a no-op; use non-zero values so the compute path is
    # actually exercised).
    params = {
        "we": jax.random.normal(kwe, (R, D), dtype=jnp.float32) * 0.05,     # Linear(D -> R)
        "be": jax.random.normal(kbe, (R,), dtype=jnp.float32) * 0.05,
        "wa": jax.random.normal(kwa, (R, D, H), dtype=jnp.float32) * 0.1,   # conv_A: D -> H
        "ba": jax.random.normal(kba, (R, H), dtype=jnp.float32) * 0.1,
        "wb": jax.random.normal(kwb, (R, D, H // GROUPS),                   # conv_B: grouped H -> D
                                dtype=jnp.float32) * 0.1,
        "bb": jax.random.normal(kbb, (R, D), dtype=jnp.float32) * 0.1,
    }

    ref = adapter_router_plus_ref(x, params, scale=SCALE, t=T, groups=GROUPS)

    # f32 IO path
    out = adapter_router_plus(x, params, scale=SCALE, t=T, groups=GROUPS)
    out = jax.block_until_ready(out)
    # bf16 MXU operands (f32 accumulation) => compare at ~1e-2 tolerance.
    np.testing.assert_allclose(np.asarray(out), np.asarray(ref),
                               rtol=1e-2, atol=1e-2)

    # bf16 IO path (halves the HBM stream of this bandwidth-bound kernel)
    out_bf = adapter_router_plus(x.astype(jnp.bfloat16), params,
                                 scale=SCALE, t=T, groups=GROUPS)
    out_bf = jax.block_until_ready(out_bf)
    np.testing.assert_allclose(np.asarray(out_bf.astype(jnp.float32)),
                               np.asarray(ref), rtol=5e-2, atol=5e-2)

    print("KERNEL_OK")
</pallas_src>

<mosaic_0001>
module attributes {stable_mosaic.version = 11 : i64} {
  func.func @adapter_router_kernel(%arg0: i32, %arg1: i32, %arg2: memref<1x8x32xf32, #tpu.memory_space<vmem>>, %arg3: memref<32x16xbf16, #tpu.memory_space<vmem>>, %arg4: memref<1x16xf32, #tpu.memory_space<vmem>>, %arg5: memref<16x32xbf16, #tpu.memory_space<vmem>>, %arg6: memref<1x1x16xf32, #tpu.memory_space<vmem>>, %arg7: memref<1x1x32xf32, #tpu.memory_space<vmem>>, %arg8: memref<1x8x32xf32, #tpu.memory_space<vmem>>) attributes {dimension_semantics = [#tpu.dimension_semantics<parallel>, #tpu.dimension_semantics<parallel>], iteration_bounds = array<i64: 2, 1>, scalar_prefetch = 0 : i64, scratch_operands = 0 : i64, tpu.core_type = #tpu.core_type<tc>, window_params = [{transform_indices = @transform_0, window_bounds = array<i64: 1, 8, 32>}, {pipeline_mode = #tpu.pipeline_mode<synchronous>, transform_indices = @transform_1, window_bounds = array<i64: 32, 16>}, {pipeline_mode = #tpu.pipeline_mode<synchronous>, transform_indices = @transform_2, window_bounds = array<i64: 1, 16>}, {pipeline_mode = #tpu.pipeline_mode<synchronous>, transform_indices = @transform_3, window_bounds = array<i64: 16, 32>}, {transform_indices = @transform_4, window_bounds = array<i64: 1, 1, 16>}, {transform_indices = @transform_5, window_bounds = array<i64: 1, 1, 32>}, {transform_indices = @transform_6, window_bounds = array<i64: 1, 8, 32>}]} {
    %c0 = arith.constant 0 : index
    %c0_0 = arith.constant 0 : index
    %c0_1 = arith.constant 0 : index
    %0 = vector.load %arg2[%c0, %c0_0, %c0_1] : memref<1x8x32xf32, #tpu.memory_space<vmem>>, vector<1x8x32xf32>
    %1 = vector.shape_cast %0 : vector<1x8x32xf32> to vector<8x32xf32>
    %2 = arith.truncf %1 : vector<8x32xf32> to vector<8x32xbf16>
    %c0_2 = arith.constant 0 : index
    %c0_3 = arith.constant 0 : index
    %3 = vector.load %arg3[%c0_2, %c0_3] : memref<32x16xbf16, #tpu.memory_space<vmem>>, vector<32x16xbf16>
    %cst = arith.constant dense<0.000000e+00> : vector<8x16xf32>
    %4 = tpu.matmul %2, %3, %cst {dimension_numbers = #tpu.dot_dimension_numbers<[1], [0], [0], [1], [0, 0, 1, 1], [], []>} : vector<8x32xbf16>, vector<32x16xbf16>, vector<8x16xf32> -> vector<8x16xf32>
    %c0_4 = arith.constant 0 : index
    %c0_5 = arith.constant 0 : index
    %5 = vector.load %arg4[%c0_4, %c0_5] : memref<1x16xf32, #tpu.memory_space<vmem>>, vector<1x16xf32>
    %6 = vector.broadcast %5 : vector<1x16xf32> to vector<8x16xf32>
    %7 = arith.addf %4, %6 : vector<8x16xf32>
    %8 = arith.negf %7 : vector<8x16xf32>
    %9 = math.exp %8 : vector<8x16xf32>
    %cst_6 = arith.constant 1.000000e+00 : f32
    %10 = vector.broadcast %cst_6 : f32 to vector<8x16xf32>
    %11 = arith.addf %10, %9 : vector<8x16xf32>
    %12 = arith.divf %10, %11 : vector<8x16xf32>
    %13 = arith.mulf %7, %12 : vector<8x16xf32>
    %c0_7 = arith.constant 0 : index
    %c0_8 = arith.constant 0 : index
    %c0_9 = arith.constant 0 : index
    %14 = vector.load %arg6[%c0_7, %c0_8, %c0_9] : memref<1x1x16xf32, #tpu.memory_space<vmem>>, vector<1x1x16xf32>
    %15 = vector.shape_cast %14 : vector<1x1x16xf32> to vector<1x16xf32>
    %16 = vector.broadcast %15 : vector<1x16xf32> to vector<8x16xf32>
    %17 = arith.mulf %13, %16 : vector<8x16xf32>
    %18 = arith.truncf %17 : vector<8x16xf32> to vector<8x16xbf16>
    %c0_10 = arith.constant 0 : index
    %c0_11 = arith.constant 0 : index
    %19 = vector.load %arg5[%c0_10, %c0_11] : memref<16x32xbf16, #tpu.memory_space<vmem>>, vector<16x32xbf16>
    %cst_12 = arith.constant dense<0.000000e+00> : vector<8x32xf32>
    %20 = tpu.matmul %18, %19, %cst_12 {dimension_numbers = #tpu.dot_dimension_numbers<[1], [0], [0], [1], [0, 0, 1, 1], [], []>} : vector<8x16xbf16>, vector<16x32xbf16>, vector<8x32xf32> -> vector<8x32xf32>
    %c0_13 = arith.constant 0 : index
    %c0_14 = arith.constant 0 : index
    %c0_15 = arith.constant 0 : index
    %21 = vector.load %arg7[%c0_13, %c0_14, %c0_15] : memref<1x1x32xf32, #tpu.memory_space<vmem>>, vector<1x1x32xf32>
    %22 = vector.shape_cast %21 : vector<1x1x32xf32> to vector<1x32xf32>
    %23 = vector.broadcast %22 : vector<1x32xf32> to vector<8x32xf32>
    %24 = arith.addf %20, %23 : vector<8x32xf32>
    %25 = arith.addf %24, %1 : vector<8x32xf32>
    %c0_16 = arith.constant 0 : index
    %c0_17 = arith.constant 0 : index
    %c0_18 = arith.constant 0 : index
    %26 = vector.load %arg8[%c0_16, %c0_17, %c0_18] : memref<1x8x32xf32, #tpu.memory_space<vmem>>, vector<1x8x32xf32>
    %27 = vector.shape_cast %26 : vector<1x8x32xf32> to vector<8x32xf32>
    %28 = vector.shape_cast %25 : vector<8x32xf32> to vector<1x8x32xf32>
    tpu.vector_store %arg8[%c0_16, %c0_17, %c0_18], %28 {strides = array<i32>} : memref<1x8x32xf32, #tpu.memory_space<vmem>>, vector<1x8x32xf32>,
    return
  }
  func.func @transform_0(%arg0: i32, %arg1: i32) -> (i32, i32, i32) {
    %c0_i32 = arith.constant 0 : i32
    %c0_i32_0 = arith.constant 0 : i32
    return %arg0, %arg1, %c0_i32 : i32, i32, i32
  }
  func.func @transform_1(%arg0: i32, %arg1: i32) -> (i32, i32) {
    %c0_i32 = arith.constant 0 : i32
    %c0_i32_0 = arith.constant 0 : i32
    %c0_i32_1 = arith.constant 0 : i32
    return %c0_i32, %c0_i32_0 : i32, i32
  }
  func.func @transform_2(%arg0: i32, %arg1: i32) -> (i32, i32) {
    %c0_i32 = arith.constant 0 : i32
    %c0_i32_0 = arith.constant 0 : i32
    %c0_i32_1 = arith.constant 0 : i32
    return %c0_i32, %c0_i32_0 : i32, i32
  }
  func.func @transform_3(%arg0: i32, %arg1: i32) -> (i32, i32) {
    %c0_i32 = arith.constant 0 : i32
    %c0_i32_0 = arith.constant 0 : i32
    %c0_i32_1 = arith.constant 0 : i32
    return %c0_i32, %c0_i32_0 : i32, i32
  }
  func.func @transform_4(%arg0: i32, %arg1: i32) -> (i32, i32, i32) {
    %c0_i32 = arith.constant 0 : i32
    %c0_i32_0 = arith.constant 0 : i32
    %c0_i32_1 = arith.constant 0 : i32
    return %arg0, %c0_i32, %c0_i32_0 : i32, i32, i32
  }
  func.func @transform_5(%arg0: i32, %arg1: i32) -> (i32, i32, i32) {
    %c0_i32 = arith.constant 0 : i32
    %c0_i32_0 = arith.constant 0 : i32
    %c0_i32_1 = arith.constant 0 : i32
    return %arg0, %c0_i32, %c0_i32_0 : i32, i32, i32
  }
  func.func @transform_6(%arg0: i32, %arg1: i32) -> (i32, i32, i32) {
    %c0_i32 = arith.constant 0 : i32
    %c0_i32_0 = arith.constant 0 : i32
    return %arg0, %arg1, %c0_i32 : i32, i32, i32
  }
}

</mosaic_0001>

<llo_original>
// kernel: tpu_custom_call.1
$region0: #{tpu_custom_call.1}
  #allocation0 [shape = 'u32[]', space=smem, size = 0x4, offset = 0x4, fixed_abs, tag = 'smem constant byte address 0x4 - core index']
  #allocation1 [shape = 'u32[144,128]{1,0:T(1,128)}', space=vmem, size = 0x12000, scoped, tag = 'internal scratch']
  %s0 = inlined_call_operand.vmem [shape: f32[2,8,32], index: 0, kind: input, shape index: {}]
  %s1 = inlined_call_operand.vmem [shape: bf16[32,16], index: 1, kind: input, shape index: {}]
  %s2 = inlined_call_operand.vmem [shape: f32[1,16], index: 2, kind: input, shape index: {}]
  %s3 = inlined_call_operand.vmem [shape: bf16[16,32], index: 3, kind: input, shape index: {}]
  %s4 = inlined_call_operand.vmem [shape: f32[2,1,16], index: 4, kind: input, shape index: {}]
  %s5 = inlined_call_operand.vmem [shape: f32[2,1,32], index: 5, kind: input, shape index: {}]
  %s6 = inlined_call_operand.hbm [shape: f32[2,8,32], index: 6, kind: output, shape index: {}]
  %s7 = sld [smem:[#allocation0]]
  $region57: #{tpu_custom_call.1} parent=0
    _
  %s9 = ssub.s32 1, %s7
  %s10 = scalar_select 0, %s9, %s7
  $region1: #{tpu_custom_call.1} parent=0
    #allocation2 [shape = 'u8[8192]{0}', space=vmem, size = 0x2000, scoped, tag = 'output window, operand 0']
    #allocation3 [shape = 's32[2]{0}', space=sflag, size = 0x8, scoped, tag = 'scoped memory for tpu_custom_call.1']
    %11 = vsyncpa [#allocation3], 0
    %s12 = scalar_lea.sflag [#allocation3], 1
    %13 = vsyncpa %s12, 0
    loop: start=0, step=1, limit=4
    $region2: #{tpu_custom_call.1} parent=1 // loop_pre_header
      _
    $region3: #{tpu_custom_call.1} parent=1 // loop_header
      %s15 = sphi 0, %s19
      %p16 = scmp.ge.s32.totalorder %s15, 4
      %s22 = sphi 0, %s34
      %s23 = sphi 0, %s30
      %s24 = sphi 0, %s22
      %s25 = sphi 0, %s23
      %s26 = sphi 0, %s24
      %s27 = sphi 0, %s25
      %s39 = sphi 0, %s41
      %s42 = sphi 0, %s39
      %s43 = sphi 0, %s42
      %s59 = sphi 0, %s43
      %s63 = sphi 0, %s63
      %s65 = sphi 0, %s63
      %s66 = sphi 0, %s65
      %s80 = sphi 0, %s66
      %s84 = sphi 0, %s84
      %s86 = sphi 0, %s84
      %s87 = sphi 0, %s86
      %s101 = sphi 0, %s87
      %s105 = sphi 0, %s105
      %s107 = sphi 0, %s105
      %s108 = sphi 0, %s107
      %s122 = sphi 0, %s108
      %s128 = sphi 0, %s130
      %s131 = sphi 0, %s128
      %s132 = sphi 0, %s131
      %s148 = sphi 0, %s132
      %s154 = sphi 0, %s156
      %s157 = sphi 0, %s154
      %s158 = sphi 0, %s157
      %s174 = sphi 0, %s158
      %s182 = sphi 0, %s184
      %s185 = sphi 0, %s182
      %s186 = sphi 0, %s185
      %s202 = sphi 0, %s186
    $region4: #{tpu_custom_call.1} parent=1 // loop_header_branch
      %18 = sbr.rel (%p16) target = $region8
    $region5: #{tpu_custom_call.1} parent=1 // loop_body
      %s20 = ssub.s32 %s15, 1
      %s21 = ssub.s32 %s15, 2
      %s28 = sadd.s32 1, %s23
      %p29 = scmp.ge.s32.totalorder %s28, 1
      %s30 = scalar_select %p29, 0, %s28
      %s31 = sadd.s32 1, %s22
      %s32 = scalar_select %p29, %s31, %s22
      %p33 = scmp.ge.s32.totalorder %s32, 2
      %s34 = scalar_select %p33, 0, %s32
      %s35 = ssub.s32 %s22, %s34
      %s36 = ssub.s32 %s23, %s30
      %s37 = sor.u32 %s35, %s36
      %p38 = scmp.eq.s32.totalorder %s37, 0
      %s40 = sadd.s32 %s39, 1
      %s41 = scalar_select %p38, %s39, %s40
      %p44 = pneg %p38
      %p45 = scmp.eq.s32.totalorder %s15, 1
      %p46 = por %p44, %p45
      %p47 = scmp.ne.s32.totalorder %s39, %s42
      %p48 = scmp.eq.s32.totalorder %s15, 0
      %p49 = por %p47, %p48
      %p50 = scmp.ne.s32.totalorder %s39, %s42
      %p51 = scmp.eq.s32.totalorder %s20, 1
      %p52 = por %p50, %p51
      %p53 = scmp.ne.s32.totalorder %s42, %s43
      %p54 = scmp.eq.s32.totalorder %s20, 0
      %p55 = por %p53, %p54
      %p56 = scmp.ne.s32.totalorder %s42, %s43
      %p57 = scmp.eq.s32.totalorder %s21, 1
      %p58 = por %p56, %p57
      %p60 = scmp.ne.s32.totalorder %s43, %s59
      %p61 = scmp.eq.s32.totalorder %s21, 0
      %p62 = por %p60, %p61
      %s64 = sadd.s32 %s63, 1
      %p67 = scmp.eq.s32.totalorder %s15, 1
      %p68 = scmp.ne.s32.totalorder %s63, %s65
      %p69 = scmp.eq.s32.totalorder %s15, 0
      %p70 = por %p68, %p69
      %p71 = scmp.ne.s32.totalorder %s63, %s65
      %p72 = scmp.eq.s32.totalorder %s20, 1
      %p73 = por %p71, %p72
      %p74 = scmp.ne.s32.totalorder %s65, %s66
      %p75 = scmp.eq.s32.totalorder %s20, 0
      %p76 = por %p74, %p75
      %p77 = scmp.ne.s32.totalorder %s65, %s66
      %p78 = scmp.eq.s32.totalorder %s21, 1
      %p79 = por %p77, %p78
      %p81 = scmp.ne.s32.totalorder %s66, %s80
      %p82 = scmp.eq.s32.totalorder %s21, 0
      %p83 = por %p81, %p82
      %s85 = sadd.s32 %s84, 1
      %p88 = scmp.eq.s32.totalorder %s15, 1
      %p89 = scmp.ne.s32.totalorder %s84, %s86
      %p90 = scmp.eq.s32.totalorder %s15, 0
      %p91 = por %p89, %p90
      %p92 = scmp.ne.s32.totalorder %s84, %s86
      %p93 = scmp.eq.s32.totalorder %s20, 1
      %p94 = por %p92, %p93
      %p95 = scmp.ne.s32.totalorder %s86, %s87
      %p96 = scmp.eq.s32.totalorder %s20, 0
      %p97 = por %p95, %p96
      %p98 = scmp.ne.s32.totalorder %s86, %s87
      %p99 = scmp.eq.s32.totalorder %s21, 1
      %p100 = por %p98, %p99
      %p102 = scmp.ne.s32.totalorder %s87, %s101
      %p103 = scmp.eq.s32.totalorder %s21, 0
      %p104 = por %p102, %p103
      %s106 = sadd.s32 %s105, 1
      %p109 = scmp.eq.s32.totalorder %s15, 1
      %p110 = scmp.ne.s32.totalorder %s105, %s107
      %p111 = scmp.eq.s32.totalorder %s15, 0
      %p112 = por %p110, %p111
      %p113 = scmp.ne.s32.totalorder %s105, %s107
      %p114 = scmp.eq.s32.totalorder %s20, 1
      %p115 = por %p113, %p114
      %p116 = scmp.ne.s32.totalorder %s107, %s108
      %p117 = scmp.eq.s32.totalorder %s20, 0
      %p118 = por %p116, %p117
      %p119 = scmp.ne.s32.totalorder %s107, %s108
      %p120 = scmp.eq.s32.totalorder %s21, 1
      %p121 = por %p119, %p120
      %p123 = scmp.ne.s32.totalorder %s108, %s122
      %p124 = scmp.eq.s32.totalorder %s21, 0
      %p125 = por %p123, %p124
      %s126 = ssub.s32 %s22, %s34
      %p127 = scmp.eq.s32.totalorder %s126, 0
      %s129 = sadd.s32 %s128, 1
      %s130 = scalar_select %p127, %s128, %s129
      %p133 = pneg %p127
      %p134 = scmp.eq.s32.totalorder %s15, 1
      %p135 = por %p133, %p134
      %p136 = scmp.ne.s32.totalorder %s128, %s131
      %p137 = scmp.eq.s32.totalorder %s15, 0
      %p138 = por %p136, %p137
      %p139 = scmp.ne.s32.totalorder %s128, %s131
      %p140 = scmp.eq.s32.totalorder %s20, 1
      %p141 = por %p139, %p140
      %p142 = scmp.ne.s32.totalorder %s131, %s132
      %p143 = scmp.eq.s32.totalorder %s20, 0
      %p144 = por %p142, %p143
      %p145 = scmp.ne.s32.totalorder %s131, %s132
      %p146 = scmp.eq.s32.totalorder %s21, 1
      %p147 = por %p145, %p146
      %p149 = scmp.ne.s32.totalorder %s132, %s148
      %p150 = scmp.eq.s32.totalorder %s21, 0
      %p151 = por %p149, %p150
      %s152 = ssub.s32 %s22, %s34
      %p153 = scmp.eq.s32.totalorder %s152, 0
      %s155 = sadd.s32 %s154, 1
      %s156 = scalar_select %p153, %s154, %s155
      %p159 = pneg %p153
      %p160 = scmp.eq.s32.totalorder %s15, 1
      %p161 = por %p159, %p160
      %p162 = scmp.ne.s32.totalorder %s154, %s157
      %p163 = scmp.eq.s32.totalorder %s15, 0
      %p164 = por %p162, %p163
      %p165 = scmp.ne.s32.totalorder %s154, %s157
      %p166 = scmp.eq.s32.totalorder %s20, 1
      %p167 = por %p165, %p166
      %p168 = scmp.ne.s32.totalorder %s157, %s158
      %p169 = scmp.eq.s32.totalorder %s20, 0
      %p170 = por %p168, %p169
      %p171 = scmp.ne.s32.totalorder %s157, %s158
      %p172 = scmp.eq.s32.totalorder %s21, 1
      %p173 = por %p171, %p172
      %p175 = scmp.ne.s32.totalorder %s158, %s174
      %p176 = scmp.eq.s32.totalorder %s21, 0
      %p177 = por %p175, %p176
      %s178 = ssub.s32 %s22, %s34
      %s179 = ssub.s32 %s23, %s30
      %s180 = sor.u32 %s178, %s179
      %p181 = scmp.eq.s32.totalorder %s180, 0
      %s183 = sadd.s32 %s182, 1
      %s184 = scalar_select %p181, %s182, %s183
      %p187 = pneg %p181
      %p188 = scmp.eq.s32.totalorder %s15, 1
      %p189 = por %p187, %p188
      %p190 = scmp.ne.s32.totalorder %s182, %s185
      %p191 = scmp.eq.s32.totalorder %s15, 0
      %p192 = por %p190, %p191
      %p193 = scmp.ne.s32.totalorder %s182, %s185
      %p194 = scmp.eq.s32.totalorder %s20, 1
      %p195 = por %p193, %p194
      %p196 = scmp.ne.s32.totalorder %s185, %s186
      %p197 = scmp.eq.s32.totalorder %s20, 0
      %p198 = por %p196, %p197
      %p199 = scmp.ne.s32.totalorder %s185, %s186
      %p200 = scmp.eq.s32.totalorder %s21, 1
      %p201 = por %p199, %p200
      %p203 = scmp.ne.s32.totalorder %s186, %s202
      %p204 = scmp.eq.s32.totalorder %s21, 0
      %p205 = por %p203, %p204
      %p206 = scmp.le.s32.totalorder 1, %s15
      %p207 = scmp.lt.s32.totalorder %s15, 3
      %p208 = pnand %p206, %p207
      %p209 = pneg %p208
      // Predicated region
      $region9: #{tpu_custom_call.1} parent=5 // pred_check
        _
      $region10: #{tpu_custom_call.1} parent=5 // pred_check_branch
        %211 = sbr.rel (%p208) target = $region12
      $region11: #{tpu_custom_call.1} parent=5 // pred_region
        %s212 = ssub.s32 %s15, 1
        // Predicated region
        $region13: #{tpu_custom_call.1} parent=11 // pred_check
          %p213 = pneg %p76
        $region14: #{tpu_custom_call.1} parent=11 // pred_check_branch
          %215 = sbr.rel (%p213) target = $region16
        $region15: #{tpu_custom_call.1} parent=11 // pred_region
          _
        $region16: #{tpu_custom_call.1} parent=11 // pred_fallthru
          _
        // Predicated region
        $region17: #{tpu_custom_call.1} parent=11 // pred_check
          %p216 = pneg %p97
        $region18: #{tpu_custom_call.1} parent=11 // pred_check_branch
          %218 = sbr.rel (%p216) target = $region20
        $region19: #{tpu_custom_call.1} parent=11 // pred_region
          _
        $region20: #{tpu_custom_call.1} parent=11 // pred_fallthru
          _
        // Predicated region
        $region21: #{tpu_custom_call.1} parent=11 // pred_check
          %p219 = pneg %p118
        $region22: #{tpu_custom_call.1} parent=11 // pred_check_branch
          %221 = sbr.rel (%p219) target = $region24
        $region23: #{tpu_custom_call.1} parent=11 // pred_region
          _
        $region24: #{tpu_custom_call.1} parent=11 // pred_fallthru
          _
      $region12: #{tpu_custom_call.1} parent=5 // pred_fallthru
        _
      %p222 = scmp.lt.s32.totalorder %s15, 2
      // Predicated region
      $region25: #{tpu_custom_call.1} parent=5 // pred_check
        %p223 = pneg %p222
      $region26: #{tpu_custom_call.1} parent=5 // pred_check_branch
        %225 = sbr.rel (%p223) target = $region28
      $region27: #{tpu_custom_call.1} parent=5 // pred_region
        // Predicated region
        $region29: #{tpu_custom_call.1} parent=27 // pred_check
          %p226 = pneg %p49
        $region30: #{tpu_custom_call.1} parent=27 // pred_check_branch
          %228 = sbr.rel (%p226) target = $region32
        $region31: #{tpu_custom_call.1} parent=27 // pred_region
          %p229 = scmp.lt.s32.totalorder %s22, 1
          %s230 = scalar_select %p229, %s22, 1
          %p231 = scmp.lt.s32.totalorder %s23, 0
          %s232 = scalar_select %p231, %s23, 0
          %s233 = sadd.s32 %s232, %s230
          %s234 = smul.addr %s233, 8
          %s235 = scalar_lea.vmem %s0, %s234
        $region32: #{tpu_custom_call.1} parent=27 // pred_fallthru
          _
        // Predicated region
        $region33: #{tpu_custom_call.1} parent=27 // pred_check
          %p236 = pneg %p138
        $region34: #{tpu_custom_call.1} parent=27 // pred_check_branch
          %238 = sbr.rel (%p236) target = $region36
        $region35: #{tpu_custom_call.1} parent=27 // pred_region
          %p239 = scmp.lt.s32.totalorder %s22, 1
          %s240 = scalar_select %p239, %s22, 1
          %s241 = scalar_lea.vmem %s4, %s240
        $region36: #{tpu_custom_call.1} parent=27 // pred_fallthru
          _
        // Predicated region
        $region37: #{tpu_custom_call.1} parent=27 // pred_check
          %p242 = pneg %p164
        $region38: #{tpu_custom_call.1} parent=27 // pred_check_branch
          %244 = sbr.rel (%p242) target = $region40
        $region39: #{tpu_custom_call.1} parent=27 // pred_region
          %p245 = scmp.lt.s32.totalorder %s22, 1
          %s246 = scalar_select %p245, %s22, 1
          %s247 = scalar_lea.vmem %s5, %s246
        $region40: #{tpu_custom_call.1} parent=27 // pred_fallthru
          _
      $region28: #{tpu_custom_call.1} parent=5 // pred_fallthru
        _
      %p248 = scmp.le.s32.totalorder 1, %s15
      %p249 = scmp.lt.s32.totalorder %s15, 3
      %p250 = pnand %p248, %p249
      %p251 = pneg %p250
      // Predicated region
      $region41: #{tpu_custom_call.1} parent=5 // pred_check
        _
      $region42: #{tpu_custom_call.1} parent=5 // pred_check_branch
        %253 = sbr.rel (%p250) target = $region44
      $region43: #{tpu_custom_call.1} parent=5 // pred_region
        %s254 = ssub.s32 %s15, 1
        %p255 = scmp.lt.s32.totalorder %s24, 1
        %s256 = scalar_select %p255, %s24, 1
        %p257 = scmp.lt.s32.totalorder %s25, 0
        %s258 = scalar_select %p257, %s25, 0
        %s259 = sadd.s32 %s258, %s256
        %s260 = smul.addr %s259, 8
        %s261 = scalar_lea.vmem %s0, %s260
        %p262 = pneg %p55
        %p263 = pneg %p52
        %p264 = pneg %p76
        %p265 = pneg %p73
        %p266 = pneg %p97
        %p267 = pneg %p94
        %p268 = pneg %p118
        %p269 = pneg %p115
        %p270 = scmp.lt.s32.totalorder %s24, 1
        %s271 = scalar_select %p270, %s24, 1
        %s272 = scalar_lea.vmem %s4, %s271
        %p273 = pneg %p144
        %p274 = pneg %p141
        %p275 = scmp.lt.s32.totalorder %s24, 1
        %s276 = scalar_select %p275, %s24, 1
        %s277 = scalar_lea.vmem %s5, %s276
        %p278 = pneg %p170
        %p279 = pneg %p167
        %p280 = pneg %p198
        %p281 = pneg %p195
        %s282 = sand.u32 %s185, 1
        %s283 = scalar_lea.sflag [#allocation3], %s282
        %s284 = sand.u32 %s185, 1
        %s285 = smul.addr %s284, 8
        %s286 = scalar_lea.vmem [#allocation2], %s285
        %p287 = scmp.lt.s32.totalorder %s24, 1
        %s288 = scalar_select %p287, %s24, 1
        %p289 = scmp.lt.s32.totalorder %s25, 0
        %s290 = scalar_select %p289, %s25, 0
        %s291 = sadd.s32 %s290, %s288
        %s292 = smul.addr %s291, 8
        %s293 = scalar_lea.vmem %s0, %s292
        %p294 = scmp.lt.s32.totalorder %s24, 1
        %s295 = scalar_select %p294, %s24, 1
        %s296 = scalar_lea.vmem %s4, %s295
        %p297 = scmp.lt.s32.totalorder %s24, 1
        %s298 = scalar_select %p297, %s24, 1
        %s299 = scalar_lea.vmem %s5, %s298
        %v301 = vld [vmem:[%s293] sm:$0xff]
        %v302 = vpack.c.bf16 %v301, %v301
        %v303 = vld [vmem:[%s1] sm:$0xf]
        %v304 = vld [vmem:[%s1 + $0x4] sm:$0xf]
        %v305 = vld [vmem:[%s1 + $0x8] sm:$0xf]
        %v306 = vld [vmem:[%s1 + $0xc] sm:$0xf]
        %v307 = vld [vmem:[%s2] sm:$0x1]
        %v309 = vlaneseq
        %v310 = vshrl.u32 %v309, 7
        %v311 = vsub.s32 0, %v310
        %v312 = vrot.slane %v307, %v311
        %v318 = vunpack.c.l.b16 %v303
        %v319 = vunpack.c.l.b16 %v304
        %v320 = vunpack.c.l.b16 %v305
        %v321 = vunpack.c.l.b16 %v306
        %v322 = vpack.c.b16 %v319, %v318
        %v323 = vpack.c.b16 %v321, %v320
        %vm326 = vcmask 261120
        %v328 = vsel %vm326, %v302, 0
        %330 = vmatprep.subr.bf16.mxu0 0
        %331 = vmatpush1.bf16.msra.mxu0 %v322
        %332 = vmatprep.subr.bf16.mxu0 0
        %333 = vmatpush1.bf16.msra.mxu0 %v323
        %334 = vmatprep.subr.bf16.mxu0 0
        %335 = vmatpush1.bf16.msra.mxu0 0
        %336 = vmatprep.subr.bf16.mxu0 0
        %337 = vmatpush1.bf16.msra.mxu0 0
        %338 = vmatprep.subr.bf16.mxu0 0
        %339 = vmatpush1.bf16.msra.mxu0 0
        %340 = vmatprep.subr.bf16.mxu0 0
        %341 = vmatpush1.bf16.msra.mxu0 0
        %342 = vmatprep.subr.bf16.mxu0 0
        %343 = vmatpush1.bf16.msra.mxu0 0
        %344 = vmatprep.subr.bf16.mxu0 0
        %345 = vmatpush1.bf16.msra.mxu0 0
        %346 = vmatprep.subr.bf16.mxu0 0
        %347 = vmatpush1.bf16.msra.mxu0 0
        %348 = vmatprep.subr.bf16.mxu0 0
        %349 = vmatpush1.bf16.msra.mxu0 0
        %350 = vmatprep.subr.bf16.mxu0 0
        %351 = vmatpush1.bf16.msra.mxu0 0
        %352 = vmatprep.subr.bf16.mxu0 0
        %353 = vmatpush1.bf16.msra.mxu0 0
        %354 = vmatprep.subr.bf16.mxu0 0
        %355 = vmatpush1.bf16.msra.mxu0 0
        %356 = vmatprep.subr.bf16.mxu0 0
        %357 = vmatpush1.bf16.msra.mxu0 0
        %358 = vmatprep.subr.bf16.mxu0 0
        %359 = vmatpush1.bf16.msra.mxu0 0
        %360 = vmatprep.subr.bf16.mxu0 0
        %361 = vmatpush1.bf16.msra.mxu0 0
        %362 = vmatprep.mubr.bf16.mxu0 0
        %363 = vmatmul.mubr.bf16.gmra.mrb[0].mxu0 %v328
        %v364 = vpop.f32.mrb[0].mxu0
        %v365 = vadd.f32 %v312, %v364
        %v366 = vpop.f32.mrb[0].mxu0
        %v367 = vpop.f32.mrb[0].mxu0
        %v368 = vpop.f32.mrb[0].mxu0
        %369 = vdwg.mxu0
        %v370 = vxor.u32 %v365, 2147483648
        %v371 = vmul.f32 %v370, 1.442695
        %v372 = vpow.pop %v371
        %v373 = vadd.f32 %v372, 1.0
        %v374 = vrcp.pop %v373
        %v375 = vmul.f32 1.0, %v374
        %v376 = vmul.f32 %v365, %v375
        %v377 = vld [vmem:[%s296] sm:$0x1]
        %v379 = vlaneseq
        %v380 = vshrl.u32 %v379, 7
        %v381 = vsub.s32 0, %v380
        %v382 = vrot.slane %v377, %v381
        %v384 = vmul.f32 %v376, %v382
        %v385 = vpack.c.bf16 %v384, %v384
        %v386 = vld [vmem:[%s3] sm:$0xf]
        %v387 = vld [vmem:[%s3 + $0x4] sm:$0xf]
        %v388 = vld [vmem:[%s299] sm:$0x1]
        %v390 = vlaneseq
        %v391 = vshrl.u32 %v390, 7
        %v392 = vsub.s32 0, %v391
        %v393 = vrot.slane %v388, %v392
        %v397 = vunpack.c.l.b16 %v386
        %v398 = vunpack.c.l.b16 %v387
        %v399 = vpack.c.b16 %v398, %v397
        %vm401 = vcmask 130048
        %v403 = vsel %vm401, %v385, 0
        %405 = vmatprep.subr.bf16.mxu0 0
        %406 = vmatpush1.bf16.msra.mxu0 %v399
        %407 = vmatprep.subr.bf16.mxu0 0
        %408 = vmatpush1.bf16.msra.mxu0 0
        %409 = vmatprep.subr.bf16.mxu0 0
        %410 = vmatpush1.bf16.msra.mxu0 0
        %411 = vmatprep.subr.bf16.mxu0 0
        %412 = vmatpush1.bf16.msra.mxu0 0
        %413 = vmatprep.subr.bf16.mxu0 0
        %414 = vmatpush1.bf16.msra.mxu0 0
        %415 = vmatprep.subr.bf16.mxu0 0
        %416 = vmatpush1.bf16.msra.mxu0 0
        %417 = vmatprep.subr.bf16.mxu0 0
        %418 = vmatpush1.bf16.msra.mxu0 0
        %419 = vmatprep.subr.bf16.mxu0 0
        %420 = vmatpush1.bf16.msra.mxu0 0
        %421 = vmatprep.subr.bf16.mxu0 0
        %422 = vmatpush1.bf16.msra.mxu0 0
        %423 = vmatprep.subr.bf16.mxu0 0
        %424 = vmatpush1.bf16.msra.mxu0 0
        %425 = vmatprep.subr.bf16.mxu0 0
        %426 = vmatpush1.bf16.msra.mxu0 0
        %427 = vmatprep.subr.bf16.mxu0 0
        %428 = vmatpush1.bf16.msra.mxu0 0
        %429 = vmatprep.subr.bf16.mxu0 0
        %430 = vmatpush1.bf16.msra.mxu0 0
        %431 = vmatprep.subr.bf16.mxu0 0
        %432 = vmatpush1.bf16.msra.mxu0 0
        %433 = vmatprep.subr.bf16.mxu0 0
        %434 = vmatpush1.bf16.msra.mxu0 0
        %435 = vmatprep.subr.bf16.mxu0 0
        %436 = vmatpush1.bf16.msra.mxu0 0
        %437 = vmatprep.mubr.bf16.mxu0 0
        %438 = vmatmul.mubr.bf16.gmra.mrb[0].mxu0 %v403
        %v439 = vpop.f32.mrb[0].mxu0
        %v440 = vadd.f32 %v393, %v439
        %v441 = vpop.f32.mrb[0].mxu0
        %v442 = vpop.f32.mrb[0].mxu0
        %v443 = vpop.f32.mrb[0].mxu0
        %444 = vdwg.mxu0
        %v445 = vadd.f32 %v440, %v301
        %446 = vst.msk [vmem:[%s286] sm:$0xff] %vm326, %v445
        %s447 = sand.u32 %s185, 1
        %s448 = scalar_lea.sflag [#allocation3], %s447
        %s449 = sand.u32 %s185, 1
        %s450 = smul.addr %s449, 8
        %s451 = scalar_lea.vmem [#allocation2], %s450
        // Predicated region
        $region45: #{tpu_custom_call.1} parent=43 // pred_check
          %p452 = pneg %p195
        $region46: #{tpu_custom_call.1} parent=43 // pred_check_branch
          %454 = sbr.rel (%p452) target = $region48
        $region47: #{tpu_custom_call.1} parent=43 // pred_region
          %s456 = ssub.s32 128, 128
          %457 = vsyncadd %s448, %s456
          %s458 = sadd.s32 %s25, %s24
          %s459 = smul.addr %s458, 128
          %s460 = scalar_lea.hbm %s6, %s459
          %s462 = sshll.u32 %s451, 4
          %s463 = int_to_ptr.vmem [resolvable:$true] %s462
          %465 = dma.vmem_to_hbm [thread:$0]  %s463, 128, %s460, %s448
        $region48: #{tpu_custom_call.1} parent=43 // pred_fallthru
          _
      $region44: #{tpu_custom_call.1} parent=5 // pred_fallthru
        _
      %p466 = scmp.le.s32.totalorder 2, %s15
      // Predicated region
      $region49: #{tpu_custom_call.1} parent=5 // pred_check
        %p467 = pneg %p466
      $region50: #{tpu_custom_call.1} parent=5 // pred_check_branch
        %469 = sbr.rel (%p467) target = $region52
      $region51: #{tpu_custom_call.1} parent=5 // pred_region
        %s470 = ssub.s32 %s15, 2
        // Predicated region
        $region53: #{tpu_custom_call.1} parent=51 // pred_check
          %p471 = pneg %p201
        $region54: #{tpu_custom_call.1} parent=51 // pred_check_branch
          %473 = sbr.rel (%p471) target = $region56
        $region55: #{tpu_custom_call.1} parent=51 // pred_region
          %s474 = sand.u32 %s186, 1
          %s475 = scalar_lea.sflag [#allocation3], %s474
          %s476 = sand.u32 %s186, 1
          %s477 = smul.addr %s476, 8
          %s478 = scalar_lea.vmem [#allocation2], %s477
          %479 = dma.done %s475, 128
        $region56: #{tpu_custom_call.1} parent=51 // pred_fallthru
          _
      $region52: #{tpu_custom_call.1} parent=5 // pred_fallthru
        _
    $region6: #{tpu_custom_call.1} parent=1 // loop_footer
      %s19 = sadd.s32 1, %s15
    $region7: #{tpu_custom_call.1} parent=1 // loop_footer_branch
      %14 = sbr.rel target = $region3
    $region8: #{tpu_custom_call.1} parent=1 // loop_exit
      _
    %480 = vsyncpa [#allocation3], 1
    %s481 = scalar_lea.sflag [#allocation3], 1
    %482 = vsyncpa %s481, 1

</llo_original>
